<compile_context>
chip_gen: v7x
topology: tpu7x:2x2x1
jax: 0.10.0
libtpu: 0.0.40
codegen_flags: <defaults>
</compile_context>

<pallas_src>
import functools

import jax
import jax.numpy as jnp
from jax import lax
from jax.experimental import pallas as pl
from jax.experimental.pallas import tpu as pltpu

LANE = 128


# ---------------------------------------------------------------------------
# Fused Pallas kernel: GCN layer 1 (conv folded into W1) + relu + GCN layer 2
# ---------------------------------------------------------------------------
def matrix_gcn_kernel(a_ref, dinv_ref, x_ref, w1_ref, b1pre_ref, b1_ref,
                      w2_ref, b2_ref, o_ref):
    # a_ref    : (N, N)   bf16 raw A + I counts (exact small ints in bf16)
    # dinv_ref : (N, 1)   f32  D^{-1/2} (computed in glue JAX)
    # x_ref    : (N, L)   bf16 x.reshape(N, -1)  (transpose folded into W1)
    # w1_ref   : (L, H)   bf16 conv + permute folded layer-1 weight
    # b1pre_*  : (1, H)   f32  conv bias folded through layer-1 linear
    # b1_ref   : (1, H)   f32  layer-1 GCN bias (post-propagation)
    # w2_ref   : (H, 128) bf16 layer-2 weight, zero-padded to 128 lanes
    # b2_ref   : (1, 128) f32  layer-2 bias, zero-padded
    # o_ref    : (N, 128) f32  lane-dense padded output slab
    n = a_ref.shape[0]
    hid = w1_ref.shape[1]
    a_bf = a_ref[...]

    # Single hoisted broadcast of D^{-1/2}; reused 4x below.
    dinv = jnp.broadcast_to(dinv_ref[...], (n, hid))

    # layer 1: A_hat @ (X @ W1_fold + b1_pre) + b1, relu
    #   with A_hat @ V == dinv * ((A + I) @ (dinv * V))
    h = jnp.dot(x_ref[...], w1_ref[...],
                preferred_element_type=jnp.float32) + b1pre_ref[...]
    h = dinv * jnp.dot(a_bf, (dinv * h).astype(jnp.bfloat16),
                       preferred_element_type=jnp.float32)
    h = jnp.maximum(h + b1_ref[...], 0.0)

    # layer 2, reordered: (A_hat @ H) @ W2 == A_hat @ (H @ W2); propagate
    # first so the NxN matmul stays hidden-wide (32) instead of 128-wide.
    p = dinv * jnp.dot(a_bf, (dinv * h).astype(jnp.bfloat16),
                       preferred_element_type=jnp.float32)
    o_ref[...] = jnp.dot(p.astype(jnp.bfloat16), w2_ref[...],
                         preferred_element_type=jnp.float32) + b2_ref[...]


def _full_spec(shape):
    return pl.BlockSpec(shape, lambda i: (0,) * len(shape))


def fused_matrix_gcn(a_bf, dinv, x_in, w1, b1_pre, b1, w2, b2):
    n = a_bf.shape[0]
    l = x_in.shape[1]
    hid = w1.shape[1]
    out_w = w2.shape[1]
    # TODO(synk): for large N, split into two row-tiled pallas_calls (one per
    # GCN layer; A blocked (tm, N), row axis "parallel", tm sized against the
    # per-generation VMEM budget) — at this toy size that is pure overhead.
    return pl.pallas_call(
        matrix_gcn_kernel,
        out_shape=jax.ShapeDtypeStruct((n, out_w), jnp.float32),
        grid=(1,),
        in_specs=[
            _full_spec((n, n)),
            _full_spec((n, 1)),
            _full_spec((n, l)),
            _full_spec((l, hid)),
            _full_spec((1, hid)),
            _full_spec((1, hid)),
            _full_spec((hid, out_w)),
            _full_spec((1, out_w)),
        ],
        out_specs=_full_spec((n, out_w)),
        compiler_params=pltpu.CompilerParams(
            dimension_semantics=("arbitrary",),
            vmem_limit_bytes=32 * 1024 * 1024),
    )(a_bf, dinv, x_in, w1, b1_pre, b1, w2, b2)


# ---------------------------------------------------------------------------
# Glue: adjacency + normalization, one-time weight folding, forward
# ---------------------------------------------------------------------------
def build_normalized_adjacency(edge_index, num_nodes):
    """bf16 (A + I) raw counts and f32 D^{-1/2} (PyG direction src -> dst)."""
    # TODO(synk): dynamic 2-D scatter-add has no clean small-size Pallas TPU
    # equivalent; the adjacency build stays in glue JAX.
    src = edge_index[0]
    dst = edge_index[1]
    loop = jnp.arange(num_nodes, dtype=edge_index.dtype)
    src = jnp.concatenate([src, loop])
    dst = jnp.concatenate([dst, loop])
    a = jnp.zeros((num_nodes, num_nodes), jnp.float32).at[dst, src].add(1.0)
    deg = jnp.sum(a, axis=1, keepdims=True)
    dinv = jnp.where(deg > 0.0, lax.rsqrt(deg), 0.0)
    return a.astype(jnp.bfloat16), dinv


def prepare_effective_params(params, d1, d2):
    """Fold Conv1d + channel-major permute + input transpose into W1/biases.

    Pure parameter preprocessing — call ONCE at init, not per forward.
    """
    wc = params["wc"]                      # (24, 64)   conv weight, transposed
    bc = params["bc"]                      # (1, 64)    conv bias
    w1 = params["w1"]                      # (64*P, H)  GCN1 weight (in, out)
    b1 = params["b1"]                      # (1, H)
    w2 = params["w2"]                      # (H, E)
    b2 = params["b2"]                      # (1, E)

    L = d1 * d2
    assert L % 24 == 0, "feature length must be divisible by conv kernel/stride"
    p = L // 24
    hid = w1.shape[1]
    emb = w2.shape[1]

    # conv-as-matmul fold: x0 @ W1 == x_flat @ W1_eff + b1_pre
    w1_r = w1.reshape(64, p, hid)                                  # [c, p, j]
    w1_eff = jnp.einsum("tc,cpj->ptj", wc, w1_r).reshape(L, hid)   # over x_flat
    b1_pre = bc @ w1_r.sum(axis=1)                                 # (1, H)

    # fold x.transpose(1, 2).flatten(1) into the weight rows so the kernel can
    # take x.reshape(N, L) directly (x_flat[n, d2*D1+d1] == x_plain[n, d1*D2+d2])
    w1_fold = (w1_eff.reshape(d2, d1, hid)
                     .transpose(1, 0, 2)
                     .reshape(L, hid))

    # lane-dense padded layer-2 weight / bias (output slab width multiple of 128)
    out_w = ((emb + LANE - 1) // LANE) * LANE
    w2_pad = jnp.zeros((hid, out_w), jnp.float32).at[:, :emb].set(w2)
    b2_pad = jnp.zeros((1, out_w), jnp.float32).at[:, :emb].set(b2)

    return {
        "w1": w1_fold.astype(jnp.bfloat16),
        "b1_pre": b1_pre.astype(jnp.float32),
        "b1": b1.astype(jnp.float32),
        "w2": w2_pad.astype(jnp.bfloat16),
        "b2": b2_pad.astype(jnp.float32),
    }


def matrix_gcn_forward(x, edge_index, eff, emb):
    n, d1, d2 = x.shape
    a_bf, dinv = build_normalized_adjacency(edge_index, n)
    x_in = x.reshape(n, d1 * d2).astype(jnp.bfloat16)   # transpose folded into W1
    out_pad = fused_matrix_gcn(a_bf, dinv, x_in, eff["w1"], eff["b1_pre"],
                               eff["b1"], eff["w2"], eff["b2"])
    return out_pad[:, :emb]


# ---------------------------------------------------------------------------
# Pure-JAX reference (mirrors the PyTorch module exactly, all f32)
# ---------------------------------------------------------------------------
def matrix_gcn_reference(x, edge_index, params):
    n = x.shape[0]
    x_flat = jnp.transpose(x, (0, 2, 1)).reshape(n, -1)
    p = x_flat.shape[1] // 24
    conv = x_flat.reshape(n * p, 24) @ params["wc"] + params["bc"]     # (N*P,64)
    x0 = jnp.transpose(conv.reshape(n, p, 64), (0, 2, 1)).reshape(n, -1)
    src, dst = edge_index[0], edge_index[1]
    loop = jnp.arange(n, dtype=edge_index.dtype)
    src = jnp.concatenate([src, loop])
    dst = jnp.concatenate([dst, loop])
    a = jnp.zeros((n, n), jnp.float32).at[dst, src].add(1.0)
    deg = a.sum(axis=1)
    dinv = jnp.where(deg > 0, 1.0 / jnp.sqrt(deg), 0.0)
    a_hat = dinv[:, None] * a * dinv[None, :]
    h = a_hat @ (x0 @ params["w1"]) + params["b1"]
    h = jnp.maximum(h, 0.0)
    return a_hat @ (h @ params["w2"]) + params["b2"]


def init_params(key, in_channels, hidden_channels, embedding_dim):
    k = jax.random.split(key, 6)
    return {
        # Conv1d weight (64, 1, 24) stored transposed as (24, 64)
        "wc": 0.1 * jax.random.normal(k[0], (24, 64), jnp.float32),
        "bc": 0.1 * jax.random.normal(k[1], (1, 64), jnp.float32),
        # GCNConv linear weights stored (in, out); biases applied post-propagate
        "w1": 0.1 * jax.random.normal(k[2], (in_channels, hidden_channels), jnp.float32),
        "b1": 0.1 * jax.random.normal(k[3], (1, hidden_channels), jnp.float32),
        "w2": 0.1 * jax.random.normal(k[4], (hidden_channels, embedding_dim), jnp.float32),
        "b2": 0.1 * jax.random.normal(k[5], (1, embedding_dim), jnp.float32),
    }


if __name__ == "__main__":
    key = jax.random.PRNGKey(0)
    k_x, k_p = jax.random.split(key)

    # N=8 nodes, per-node matrix (24, 2) -> flattened length 48 -> 2 conv
    # windows -> conv features 64*2 = 128 = in_channels.
    N, D1, D2 = 8, 24, 2
    in_channels = 64 * (D1 * D2 // 24)   # 128
    hidden_channels = 32
    embedding_dim = 16

    x = jax.random.normal(k_x, (N, D1, D2), jnp.float32)
    # deterministic ring graph (both directions)
    src = jnp.arange(N, dtype=jnp.int32)
    dst = (src + 1) % N
    edge_index = jnp.stack(
        [jnp.concatenate([src, dst]), jnp.concatenate([dst, src])], axis=0
    )

    params = init_params(k_p, in_channels, hidden_channels, embedding_dim)

    # Weight folding runs once, outside the jitted per-step graph.
    eff = prepare_effective_params(params, D1, D2)

    fwd = jax.jit(matrix_gcn_forward, static_argnums=(3,))
    out = fwd(x, edge_index, eff, embedding_dim)
    jax.block_until_ready(out)
    assert out.shape == (N, embedding_dim), out.shape

    ref = matrix_gcn_reference(x, edge_index, params)
    max_err = float(jnp.max(jnp.abs(out - ref)))
    assert max_err < 5e-2, f"mismatch vs reference: {max_err}"

    print("KERNEL_OK")
</pallas_src>

<mosaic_0001>
module attributes {stable_mosaic.version = 11 : i64} {
  func.func @matrix_gcn_kernel(%arg0: i32, %arg1: memref<8x8xbf16, #tpu.memory_space<vmem>>, %arg2: memref<8x1xf32, #tpu.memory_space<vmem>>, %arg3: memref<8x48xbf16, #tpu.memory_space<vmem>>, %arg4: memref<48x32xbf16, #tpu.memory_space<vmem>>, %arg5: memref<1x32xf32, #tpu.memory_space<vmem>>, %arg6: memref<1x32xf32, #tpu.memory_space<vmem>>, %arg7: memref<32x128xbf16, #tpu.memory_space<vmem>>, %arg8: memref<1x128xf32, #tpu.memory_space<vmem>>, %arg9: memref<8x128xf32, #tpu.memory_space<vmem>>) attributes {dimension_semantics = [#tpu.dimension_semantics<arbitrary>], iteration_bounds = array<i64: 1>, scalar_prefetch = 0 : i64, scratch_operands = 0 : i64, tpu.core_type = #tpu.core_type<tc>, window_params = [{pipeline_mode = #tpu.pipeline_mode<synchronous>, transform_indices = @transform_0, window_bounds = array<i64: 8, 8>}, {pipeline_mode = #tpu.pipeline_mode<synchronous>, transform_indices = @transform_1, window_bounds = array<i64: 8, 1>}, {pipeline_mode = #tpu.pipeline_mode<synchronous>, transform_indices = @transform_2, window_bounds = array<i64: 8, 48>}, {pipeline_mode = #tpu.pipeline_mode<synchronous>, transform_indices = @transform_3, window_bounds = array<i64: 48, 32>}, {pipeline_mode = #tpu.pipeline_mode<synchronous>, transform_indices = @transform_4, window_bounds = array<i64: 1, 32>}, {pipeline_mode = #tpu.pipeline_mode<synchronous>, transform_indices = @transform_5, window_bounds = array<i64: 1, 32>}, {pipeline_mode = #tpu.pipeline_mode<synchronous>, transform_indices = @transform_6, window_bounds = array<i64: 32, 128>}, {pipeline_mode = #tpu.pipeline_mode<synchronous>, transform_indices = @transform_7, window_bounds = array<i64: 1, 128>}, {pipeline_mode = #tpu.pipeline_mode<synchronous>, transform_indices = @transform_8, window_bounds = array<i64: 8, 128>}]} {
    %c0 = arith.constant 0 : index
    %c0_0 = arith.constant 0 : index
    %0 = vector.load %arg1[%c0, %c0_0] : memref<8x8xbf16, #tpu.memory_space<vmem>>, vector<8x8xbf16>
    %c0_1 = arith.constant 0 : index
    %c0_2 = arith.constant 0 : index
    %1 = vector.load %arg2[%c0_1, %c0_2] : memref<8x1xf32, #tpu.memory_space<vmem>>, vector<8x1xf32>
    %2 = vector.shape_cast %1 : vector<8x1xf32> to vector<8x1xf32>
    %3 = vector.broadcast %2 : vector<8x1xf32> to vector<8x32xf32>
    %c0_3 = arith.constant 0 : index
    %c0_4 = arith.constant 0 : index
    %4 = vector.load %arg3[%c0_3, %c0_4] : memref<8x48xbf16, #tpu.memory_space<vmem>>, vector<8x48xbf16>
    %c0_5 = arith.constant 0 : index
    %c0_6 = arith.constant 0 : index
    %5 = vector.load %arg4[%c0_5, %c0_6] : memref<48x32xbf16, #tpu.memory_space<vmem>>, vector<48x32xbf16>
    %cst = arith.constant dense<0.000000e+00> : vector<8x32xf32>
    %6 = tpu.matmul %4, %5, %cst {dimension_numbers = #tpu.dot_dimension_numbers<[1], [0], [0], [1], [0, 0, 1, 1], [], []>} : vector<8x48xbf16>, vector<48x32xbf16>, vector<8x32xf32> -> vector<8x32xf32>
    %c0_7 = arith.constant 0 : index
    %c0_8 = arith.constant 0 : index
    %7 = vector.load %arg5[%c0_7, %c0_8] : memref<1x32xf32, #tpu.memory_space<vmem>>, vector<1x32xf32>
    %8 = vector.broadcast %7 : vector<1x32xf32> to vector<8x32xf32>
    %9 = arith.addf %6, %8 : vector<8x32xf32>
    %10 = arith.mulf %3, %9 : vector<8x32xf32>
    %11 = arith.truncf %10 : vector<8x32xf32> to vector<8x32xbf16>
    %cst_9 = arith.constant dense<0.000000e+00> : vector<8x32xf32>
    %12 = tpu.matmul %0, %11, %cst_9 {dimension_numbers = #tpu.dot_dimension_numbers<[1], [0], [0], [1], [0, 0, 1, 1], [], []>} : vector<8x8xbf16>, vector<8x32xbf16>, vector<8x32xf32> -> vector<8x32xf32>
    %13 = arith.mulf %3, %12 : vector<8x32xf32>
    %c0_10 = arith.constant 0 : index
    %c0_11 = arith.constant 0 : index
    %14 = vector.load %arg6[%c0_10, %c0_11] : memref<1x32xf32, #tpu.memory_space<vmem>>, vector<1x32xf32>
    %15 = vector.broadcast %14 : vector<1x32xf32> to vector<8x32xf32>
    %16 = arith.addf %13, %15 : vector<8x32xf32>
    %cst_12 = arith.constant 0.000000e+00 : f32
    %17 = vector.broadcast %cst_12 : f32 to vector<8x32xf32>
    %18 = arith.maximumf %16, %17 : vector<8x32xf32>
    %19 = arith.mulf %3, %18 : vector<8x32xf32>
    %20 = arith.truncf %19 : vector<8x32xf32> to vector<8x32xbf16>
    %cst_13 = arith.constant dense<0.000000e+00> : vector<8x32xf32>
    %21 = tpu.matmul %0, %20, %cst_13 {dimension_numbers = #tpu.dot_dimension_numbers<[1], [0], [0], [1], [0, 0, 1, 1], [], []>} : vector<8x8xbf16>, vector<8x32xbf16>, vector<8x32xf32> -> vector<8x32xf32>
    %22 = arith.mulf %3, %21 : vector<8x32xf32>
    %23 = arith.truncf %22 : vector<8x32xf32> to vector<8x32xbf16>
    %c0_14 = arith.constant 0 : index
    %c0_15 = arith.constant 0 : index
    %24 = vector.load %arg7[%c0_14, %c0_15] : memref<32x128xbf16, #tpu.memory_space<vmem>>, vector<32x128xbf16>
    %cst_16 = arith.constant dense<0.000000e+00> : vector<8x128xf32>
    %25 = tpu.matmul %23, %24, %cst_16 {dimension_numbers = #tpu.dot_dimension_numbers<[1], [0], [0], [1], [0, 0, 1, 1], [], []>} : vector<8x32xbf16>, vector<32x128xbf16>, vector<8x128xf32> -> vector<8x128xf32>
    %c0_17 = arith.constant 0 : index
    %c0_18 = arith.constant 0 : index
    %26 = vector.load %arg8[%c0_17, %c0_18] : memref<1x128xf32, #tpu.memory_space<vmem>>, vector<1x128xf32>
    %27 = vector.broadcast %26 : vector<1x128xf32> to vector<8x128xf32>
    %28 = arith.addf %25, %27 : vector<8x128xf32>
    %c0_19 = arith.constant 0 : index
    %c0_20 = arith.constant 0 : index
    %29 = vector.load %arg9[%c0_19, %c0_20] : memref<8x128xf32, #tpu.memory_space<vmem>>, vector<8x128xf32>
    tpu.vector_store %arg9[%c0_19, %c0_20], %28 {strides = array<i32>} : memref<8x128xf32, #tpu.memory_space<vmem>>, vector<8x128xf32>,
    return
  }
  func.func @transform_0(%arg0: i32) -> (i32, i32) {
    %c0_i32 = arith.constant 0 : i32
    %c0_i32_0 = arith.constant 0 : i32
    %c0_i32_1 = arith.constant 0 : i32
    return %c0_i32, %c0_i32_0 : i32, i32
  }
  func.func @transform_1(%arg0: i32) -> (i32, i32) {
    %c0_i32 = arith.constant 0 : i32
    %c0_i32_0 = arith.constant 0 : i32
    %c0_i32_1 = arith.constant 0 : i32
    return %c0_i32, %c0_i32_0 : i32, i32
  }
  func.func @transform_2(%arg0: i32) -> (i32, i32) {
    %c0_i32 = arith.constant 0 : i32
    %c0_i32_0 = arith.constant 0 : i32
    %c0_i32_1 = arith.constant 0 : i32
    return %c0_i32, %c0_i32_0 : i32, i32
  }
  func.func @transform_3(%arg0: i32) -> (i32, i32) {
    %c0_i32 = arith.constant 0 : i32
    %c0_i32_0 = arith.constant 0 : i32
    %c0_i32_1 = arith.constant 0 : i32
    return %c0_i32, %c0_i32_0 : i32, i32
  }
  func.func @transform_4(%arg0: i32) -> (i32, i32) {
    %c0_i32 = arith.constant 0 : i32
    %c0_i32_0 = arith.constant 0 : i32
    %c0_i32_1 = arith.constant 0 : i32
    return %c0_i32, %c0_i32_0 : i32, i32
  }
  func.func @transform_5(%arg0: i32) -> (i32, i32) {
    %c0_i32 = arith.constant 0 : i32
    %c0_i32_0 = arith.constant 0 : i32
    %c0_i32_1 = arith.constant 0 : i32
    return %c0_i32, %c0_i32_0 : i32, i32
  }
  func.func @transform_6(%arg0: i32) -> (i32, i32) {
    %c0_i32 = arith.constant 0 : i32
    %c0_i32_0 = arith.constant 0 : i32
    %c0_i32_1 = arith.constant 0 : i32
    return %c0_i32, %c0_i32_0 : i32, i32
  }
  func.func @transform_7(%arg0: i32) -> (i32, i32) {
    %c0_i32 = arith.constant 0 : i32
    %c0_i32_0 = arith.constant 0 : i32
    %c0_i32_1 = arith.constant 0 : i32
    return %c0_i32, %c0_i32_0 : i32, i32
  }
  func.func @transform_8(%arg0: i32) -> (i32, i32) {
    %c0_i32 = arith.constant 0 : i32
    %c0_i32_0 = arith.constant 0 : i32
    %c0_i32_1 = arith.constant 0 : i32
    return %c0_i32, %c0_i32_0 : i32, i32
  }
}

</mosaic_0001>

<llo_original>
// kernel: matrix_gcn_forward.1
$region0: #{matrix_gcn_forward.1}
  #allocation0 [shape = 'u32[]', space=smem, size = 0x4, offset = 0x4, fixed_abs, tag = 'smem constant byte address 0x4 - core index']
  #allocation1 [shape = 'u32[144,128]{1,0:T(1,128)}', space=vmem, size = 0x12000, scoped, tag = 'internal scratch']
  %s0 = inlined_call_operand.vmem [shape: bf16[8,8], index: 0, kind: input, shape index: {}]
  %s1 = inlined_call_operand.vmem [shape: f32[8,1], index: 1, kind: input, shape index: {}]
  %s2 = inlined_call_operand.vmem [shape: bf16[8,48], index: 2, kind: input, shape index: {}]
  %s3 = inlined_call_operand.vmem [shape: bf16[48,32], index: 3, kind: input, shape index: {}]
  %s4 = inlined_call_operand.vmem [shape: f32[1,32], index: 4, kind: input, shape index: {}]
  %s5 = inlined_call_operand.vmem [shape: f32[1,32], index: 5, kind: input, shape index: {}]
  %s6 = inlined_call_operand.vmem [shape: bf16[32,128], index: 6, kind: input, shape index: {}]
  %s7 = inlined_call_operand.vmem [shape: f32[1,128], index: 7, kind: input, shape index: {}]
  %s8 = inlined_call_operand.hbm [shape: f32[8,128], index: 8, kind: output, shape index: {}]
  %s9 = sld [smem:[#allocation0]]
  $region42: #{matrix_gcn_forward.1} parent=0
    _
  %s11 = ssub.s32 1, %s9
  %s12 = scalar_select 0, %s11, %s9
  $region1: #{matrix_gcn_forward.1} parent=0
    #allocation2 [shape = 'u8[4096]{0}', space=vmem, size = 0x1000, scoped, tag = 'output window, operand 0, single buffered']
    #allocation3 [shape = 's32[1]{0}', space=sflag, size = 0x4, scoped, tag = 'scoped memory for matrix_gcn_forward.1']
    %13 = vsyncpa [#allocation3], 0
    // Predicated region
    $region2: #{matrix_gcn_forward.1} parent=1 // pred_check
      _
    $region3: #{matrix_gcn_forward.1} parent=1 // pred_check_branch
      %15 = sbr.rel (0) target = $region5
    $region4: #{matrix_gcn_forward.1} parent=1 // pred_region
      _
    $region5: #{matrix_gcn_forward.1} parent=1 // pred_fallthru
      _
    // Predicated region
    $region6: #{matrix_gcn_forward.1} parent=1 // pred_check
      _
    $region7: #{matrix_gcn_forward.1} parent=1 // pred_check_branch
      %17 = sbr.rel (0) target = $region9
    $region8: #{matrix_gcn_forward.1} parent=1 // pred_region
      _
    $region9: #{matrix_gcn_forward.1} parent=1 // pred_fallthru
      _
    // Predicated region
    $region10: #{matrix_gcn_forward.1} parent=1 // pred_check
      _
    $region11: #{matrix_gcn_forward.1} parent=1 // pred_check_branch
      %19 = sbr.rel (0) target = $region13
    $region12: #{matrix_gcn_forward.1} parent=1 // pred_region
      _
    $region13: #{matrix_gcn_forward.1} parent=1 // pred_fallthru
      _
    // Predicated region
    $region14: #{matrix_gcn_forward.1} parent=1 // pred_check
      _
    $region15: #{matrix_gcn_forward.1} parent=1 // pred_check_branch
      %21 = sbr.rel (0) target = $region17
    $region16: #{matrix_gcn_forward.1} parent=1 // pred_region
      _
    $region17: #{matrix_gcn_forward.1} parent=1 // pred_fallthru
      _
    // Predicated region
    $region18: #{matrix_gcn_forward.1} parent=1 // pred_check
      _
    $region19: #{matrix_gcn_forward.1} parent=1 // pred_check_branch
      %23 = sbr.rel (0) target = $region21
    $region20: #{matrix_gcn_forward.1} parent=1 // pred_region
      _
    $region21: #{matrix_gcn_forward.1} parent=1 // pred_fallthru
      _
    // Predicated region
    $region22: #{matrix_gcn_forward.1} parent=1 // pred_check
      _
    $region23: #{matrix_gcn_forward.1} parent=1 // pred_check_branch
      %25 = sbr.rel (0) target = $region25
    $region24: #{matrix_gcn_forward.1} parent=1 // pred_region
      _
    $region25: #{matrix_gcn_forward.1} parent=1 // pred_fallthru
      _
    // Predicated region
    $region26: #{matrix_gcn_forward.1} parent=1 // pred_check
      _
    $region27: #{matrix_gcn_forward.1} parent=1 // pred_check_branch
      %27 = sbr.rel (0) target = $region29
    $region28: #{matrix_gcn_forward.1} parent=1 // pred_region
      _
    $region29: #{matrix_gcn_forward.1} parent=1 // pred_fallthru
      _
    // Predicated region
    $region30: #{matrix_gcn_forward.1} parent=1 // pred_check
      _
    $region31: #{matrix_gcn_forward.1} parent=1 // pred_check_branch
      %29 = sbr.rel (0) target = $region33
    $region32: #{matrix_gcn_forward.1} parent=1 // pred_region
      _
    $region33: #{matrix_gcn_forward.1} parent=1 // pred_fallthru
      _
    %v31 = vld [vmem:[%s0] sm:$0xf]
    %v32 = vld [vmem:[%s1] sm:$0xff]
    %34 = vset.pattern.permute.xlu0 0
    %35 = vperm.xlu0 %34, %v32
    %v36 = vpop.permute.xlu0 %35
    %v38 = vld [vmem:[%s2] sm:$0xf]
    %v39 = vld [vmem:[%s3] sm:$0xf]
    %v40 = vld [vmem:[%s3 + $0x4] sm:$0xf]
    %v41 = vld [vmem:[%s3 + $0x8] sm:$0xf]
    %v42 = vld [vmem:[%s3 + $0xc] sm:$0xf]
    %v43 = vld [vmem:[%s3 + $0x10] sm:$0xf]
    %v44 = vld [vmem:[%s3 + $0x14] sm:$0xf]
    %v45 = vld [vmem:[%s4] sm:$0x1]
    %v47 = vlaneseq
    %v48 = vshrl.u32 %v47, 7
    %v49 = vsub.s32 0, %v48
    %v50 = vrot.slane %v45, %v49
    %v58 = vunpack.c.l.b16 %v39
    %v59 = vunpack.c.l.b16 %v40
    %v60 = vunpack.c.l.b16 %v41
    %v61 = vunpack.c.l.b16 %v42
    %v62 = vunpack.c.l.b16 %v43
    %v63 = vunpack.c.l.b16 %v44
    %v64 = vpack.c.b16 %v59, %v58
    %v65 = vpack.c.b16 %v61, %v60
    %v66 = vpack.c.b16 %v63, %v62
    %vm70 = vcmask 392192
    %v72 = vsel %vm70, %v38, 0
    %74 = vmatprep.subr.bf16.mxu0 0
    %75 = vmatpush1.bf16.msra.mxu0 %v64
    %76 = vmatprep.subr.bf16.mxu0 0
    %77 = vmatpush1.bf16.msra.mxu0 %v65
    %78 = vmatprep.subr.bf16.mxu0 0
    %79 = vmatpush1.bf16.msra.mxu0 %v66
    %80 = vmatprep.subr.bf16.mxu0 0
    %81 = vmatpush1.bf16.msra.mxu0 0
    %82 = vmatprep.subr.bf16.mxu0 0
    %83 = vmatpush1.bf16.msra.mxu0 0
    %84 = vmatprep.subr.bf16.mxu0 0
    %85 = vmatpush1.bf16.msra.mxu0 0
    %86 = vmatprep.subr.bf16.mxu0 0
    %87 = vmatpush1.bf16.msra.mxu0 0
    %88 = vmatprep.subr.bf16.mxu0 0
    %89 = vmatpush1.bf16.msra.mxu0 0
    %90 = vmatprep.subr.bf16.mxu0 0
    %91 = vmatpush1.bf16.msra.mxu0 0
    %92 = vmatprep.subr.bf16.mxu0 0
    %93 = vmatpush1.bf16.msra.mxu0 0
    %94 = vmatprep.subr.bf16.mxu0 0
    %95 = vmatpush1.bf16.msra.mxu0 0
    %96 = vmatprep.subr.bf16.mxu0 0
    %97 = vmatpush1.bf16.msra.mxu0 0
    %98 = vmatprep.subr.bf16.mxu0 0
    %99 = vmatpush1.bf16.msra.mxu0 0
    %100 = vmatprep.subr.bf16.mxu0 0
    %101 = vmatpush1.bf16.msra.mxu0 0
    %102 = vmatprep.subr.bf16.mxu0 0
    %103 = vmatpush1.bf16.msra.mxu0 0
    %104 = vmatprep.subr.bf16.mxu0 0
    %105 = vmatpush1.bf16.msra.mxu0 0
    %106 = vmatprep.mubr.bf16.mxu0 0
    %107 = vmatmul.mubr.bf16.gmra.mrb[0].mxu0 %v72
    %v108 = vpop.f32.mrb[0].mxu0
    %v109 = vadd.f32 %v50, %v108
    %v110 = vpop.f32.mrb[0].mxu0
    %v111 = vpop.f32.mrb[0].mxu0
    %v112 = vpop.f32.mrb[0].mxu0
    %113 = vdwg.mxu0
    %v114 = vmul.f32 %v36, %v109
    %v115 = vpack.c.bf16 %v114, %v114
    %vm116 = vcmask 64512
    %v118 = vsel %vm116, %v31, 0
    %vm120 = vcmask 1043456
    %v122 = vsel %vm120, %v115, 0
    %124 = vmatprep.subr.bf16.mxu0 0
    %125 = vmatpush1.bf16.msra.mxu0 %v122
    %126 = vmatprep.subr.bf16.mxu0 0
    %127 = vmatpush1.bf16.msra.mxu0 0
    %128 = vmatprep.subr.bf16.mxu0 0
    %129 = vmatpush1.bf16.msra.mxu0 0
    %130 = vmatprep.subr.bf16.mxu0 0
    %131 = vmatpush1.bf16.msra.mxu0 0
    %132 = vmatprep.subr.bf16.mxu0 0
    %133 = vmatpush1.bf16.msra.mxu0 0
    %134 = vmatprep.subr.bf16.mxu0 0
    %135 = vmatpush1.bf16.msra.mxu0 0
    %136 = vmatprep.subr.bf16.mxu0 0
    %137 = vmatpush1.bf16.msra.mxu0 0
    %138 = vmatprep.subr.bf16.mxu0 0
    %139 = vmatpush1.bf16.msra.mxu0 0
    %140 = vmatprep.subr.bf16.mxu0 0
    %141 = vmatpush1.bf16.msra.mxu0 0
    %142 = vmatprep.subr.bf16.mxu0 0
    %143 = vmatpush1.bf16.msra.mxu0 0
    %144 = vmatprep.subr.bf16.mxu0 0
    %145 = vmatpush1.bf16.msra.mxu0 0
    %146 = vmatprep.subr.bf16.mxu0 0
    %147 = vmatpush1.bf16.msra.mxu0 0
    %148 = vmatprep.subr.bf16.mxu0 0
    %149 = vmatpush1.bf16.msra.mxu0 0
    %150 = vmatprep.subr.bf16.mxu0 0
    %151 = vmatpush1.bf16.msra.mxu0 0
    %152 = vmatprep.subr.bf16.mxu0 0
    %153 = vmatpush1.bf16.msra.mxu0 0
    %154 = vmatprep.subr.bf16.mxu0 0
    %155 = vmatpush1.bf16.msra.mxu0 0
    %156 = vmatprep.mubr.bf16.mxu0 0
    %157 = vmatmul.mubr.bf16.gmra.mrb[0].mxu0 %v118
    %v158 = vpop.f32.mrb[0].mxu0
    %v159 = vadd.f32 0.0, %v158
    %v160 = vpop.f32.mrb[0].mxu0
    %v161 = vpop.f32.mrb[0].mxu0
    %v162 = vpop.f32.mrb[0].mxu0
    %163 = vdwg.mxu0
    %v164 = vmul.f32 %v36, %v159
    %v165 = vld [vmem:[%s5] sm:$0x1]
    %v167 = vlaneseq
    %v168 = vshrl.u32 %v167, 7
    %v169 = vsub.s32 0, %v168
    %v170 = vrot.slane %v165, %v169
    %v172 = vadd.f32 %v164, %v170
    %v173 = vmax.f32 %v172, 0.0
    %v174 = vmul.f32 %v36, %v173
    %v175 = vpack.c.bf16 %v174, %v174
    %v177 = vsel %vm120, %v175, 0
    %179 = vmatprep.subr.bf16.mxu0 0
    %180 = vmatpush1.bf16.msra.mxu0 %v177
    %181 = vmatprep.subr.bf16.mxu0 0
    %182 = vmatpush1.bf16.msra.mxu0 0
    %183 = vmatprep.subr.bf16.mxu0 0
    %184 = vmatpush1.bf16.msra.mxu0 0
    %185 = vmatprep.subr.bf16.mxu0 0
    %186 = vmatpush1.bf16.msra.mxu0 0
    %187 = vmatprep.subr.bf16.mxu0 0
    %188 = vmatpush1.bf16.msra.mxu0 0
    %189 = vmatprep.subr.bf16.mxu0 0
    %190 = vmatpush1.bf16.msra.mxu0 0
    %191 = vmatprep.subr.bf16.mxu0 0
    %192 = vmatpush1.bf16.msra.mxu0 0
    %193 = vmatprep.subr.bf16.mxu0 0
    %194 = vmatpush1.bf16.msra.mxu0 0
    %195 = vmatprep.subr.bf16.mxu0 0
    %196 = vmatpush1.bf16.msra.mxu0 0
    %197 = vmatprep.subr.bf16.mxu0 0
    %198 = vmatpush1.bf16.msra.mxu0 0
    %199 = vmatprep.subr.bf16.mxu0 0
    %200 = vmatpush1.bf16.msra.mxu0 0
    %201 = vmatprep.subr.bf16.mxu0 0
    %202 = vmatpush1.bf16.msra.mxu0 0
    %203 = vmatprep.subr.bf16.mxu0 0
    %204 = vmatpush1.bf16.msra.mxu0 0
    %205 = vmatprep.subr.bf16.mxu0 0
    %206 = vmatpush1.bf16.msra.mxu0 0
    %207 = vmatprep.subr.bf16.mxu0 0
    %208 = vmatpush1.bf16.msra.mxu0 0
    %209 = vmatprep.subr.bf16.mxu0 0
    %210 = vmatpush1.bf16.msra.mxu0 0
    %211 = vmatprep.mubr.bf16.mxu0 0
    %212 = vmatmul.mubr.bf16.gmra.mrb[0].mxu0 %v118
    %v213 = vpop.f32.mrb[0].mxu0
    %v214 = vadd.f32 0.0, %v213
    %v215 = vpop.f32.mrb[0].mxu0
    %v216 = vpop.f32.mrb[0].mxu0
    %v217 = vpop.f32.mrb[0].mxu0
    %218 = vdwg.mxu0
    %v219 = vmul.f32 %v36, %v214
    %v220 = vpack.c.bf16 %v219, %v219
    %v221 = vld [vmem:[%s6] sm:$0xf]
    %v222 = vld [vmem:[%s6 + $0x4] sm:$0xf]
    %v223 = vld [vmem:[%s6 + $0x8] sm:$0xf]
    %v224 = vld [vmem:[%s6 + $0xc] sm:$0xf]
    %v225 = vld [vmem:[%s7] sm:$0x1]
    %v227 = vlaneseq
    %v228 = vshrl.u32 %v227, 7
    %v229 = vsub.s32 0, %v228
    %v230 = vrot.slane %v225, %v229
    %v236 = vunpack.c.l.b16 %v221
    %v237 = vunpack.c.l.b16 %v222
    %v238 = vunpack.c.l.b16 %v223
    %v239 = vunpack.c.l.b16 %v224
    %v240 = vpack.c.b16 %v237, %v236
    %v241 = vpack.c.b16 %v239, %v238
    %vm244 = vcmask 261120
    %v246 = vsel %vm244, %v220, 0
    %248 = vmatprep.subr.bf16.mxu0 0
    %249 = vmatpush1.bf16.msra.mxu0 %v240
    %250 = vmatprep.subr.bf16.mxu0 0
    %251 = vmatpush1.bf16.msra.mxu0 %v241
    %252 = vmatprep.subr.bf16.mxu0 0
    %253 = vmatpush1.bf16.msra.mxu0 0
    %254 = vmatprep.subr.bf16.mxu0 0
    %255 = vmatpush1.bf16.msra.mxu0 0
    %256 = vmatprep.subr.bf16.mxu0 0
    %257 = vmatpush1.bf16.msra.mxu0 0
    %258 = vmatprep.subr.bf16.mxu0 0
    %259 = vmatpush1.bf16.msra.mxu0 0
    %260 = vmatprep.subr.bf16.mxu0 0
    %261 = vmatpush1.bf16.msra.mxu0 0
    %262 = vmatprep.subr.bf16.mxu0 0
    %263 = vmatpush1.bf16.msra.mxu0 0
    %264 = vmatprep.subr.bf16.mxu0 0
    %265 = vmatpush1.bf16.msra.mxu0 0
    %266 = vmatprep.subr.bf16.mxu0 0
    %267 = vmatpush1.bf16.msra.mxu0 0
    %268 = vmatprep.subr.bf16.mxu0 0
    %269 = vmatpush1.bf16.msra.mxu0 0
    %270 = vmatprep.subr.bf16.mxu0 0
    %271 = vmatpush1.bf16.msra.mxu0 0
    %272 = vmatprep.subr.bf16.mxu0 0
    %273 = vmatpush1.bf16.msra.mxu0 0
    %274 = vmatprep.subr.bf16.mxu0 0
    %275 = vmatpush1.bf16.msra.mxu0 0
    %276 = vmatprep.subr.bf16.mxu0 0
    %277 = vmatpush1.bf16.msra.mxu0 0
    %278 = vmatprep.subr.bf16.mxu0 0
    %279 = vmatpush1.bf16.msra.mxu0 0
    %280 = vmatprep.mubr.bf16.mxu0 0
    %281 = vmatmul.mubr.bf16.gmra.mrb[0].mxu0 %v246
    %v282 = vpop.f32.mrb[0].mxu0
    %v283 = vadd.f32 %v230, %v282
    %v284 = vpop.f32.mrb[0].mxu0
    %v285 = vpop.f32.mrb[0].mxu0
    %v286 = vpop.f32.mrb[0].mxu0
    %287 = vdwg.mxu0
    %288 = vst [vmem:[#allocation2] sm:$0xff] %v283
    // Predicated region
    $region34: #{matrix_gcn_forward.1} parent=1 // pred_check
      _
    $region35: #{matrix_gcn_forward.1} parent=1 // pred_check_branch
      %290 = sbr.rel (0) target = $region37
    $region36: #{matrix_gcn_forward.1} parent=1 // pred_region
      %s292 = ssub.s32 128, 128
      %293 = vsyncadd [#allocation3], %s292
      %s295 = sshll.u32 [#allocation2], 4
      %s296 = int_to_ptr.vmem [resolvable:$true] %s295
      %298 = dma.vmem_to_hbm [thread:$0]  %s296, 128, %s8, [#allocation3]
    $region37: #{matrix_gcn_forward.1} parent=1 // pred_fallthru
      _
    // Predicated region
    $region38: #{matrix_gcn_forward.1} parent=1 // pred_check
      _
    $region39: #{matrix_gcn_forward.1} parent=1 // pred_check_branch
      %300 = sbr.rel (0) target = $region41
    $region40: #{matrix_gcn_forward.1} parent=1 // pred_region
      %301 = dma.done [#allocation3], 128
    $region41: #{matrix_gcn_forward.1} parent=1 // pred_fallthru
      _
    %302 = vsyncpa [#allocation3], 1

</llo_original>
